<compile_context>
chip_gen: v6e
topology: v6e:2x2x1
jax: 0.10.0
libtpu: 0.0.40
codegen_flags: <defaults>
</compile_context>

<pallas_src>
import functools
import math

import jax
import jax.numpy as jnp
from jax.experimental import pallas as pl
from jax.experimental.pallas import tpu as pltpu

# --- scaled-down bert-base config (hidden kept at 768 to match the explicit Linear(768, 1)) ---
HIDDEN = 768
NUM_HEADS = 12
HEAD_DIM = HIDDEN // NUM_HEADS
INTERMEDIATE = 3072
NUM_LAYERS = 2          # TODO(synk): bert-base-uncased has 12 layers; 2 kept for a small demo run
VOCAB = 128
MAX_POS = 64
TYPE_VOCAB = 2
LN_EPS = 1e-12


def _default_vmem_limit():
    """Per-generation scoped-VMEM budget: ~96 MiB on v5e/v6e (128 MiB VMEM), ~48 MiB on v7x (64 MiB)."""
    try:
        cap = pltpu.get_tpu_info().vmem_capacity_bytes
    except Exception:
        cap = 64 * 1024 * 1024
    return min(96 * 1024 * 1024, (cap * 3) // 4)


VMEM_LIMIT = _default_vmem_limit()


def _pick_tile(dim, prefs):
    """Largest preferred tile that divides `dim`; falls back to the full dim."""
    for t in prefs:
        if t <= dim and dim % t == 0:
            return t
    return dim


# ----------------------------- linear kernels -----------------------------

def _linear_1k_kernel(x_ref, w_ref, b_ref, o_ref, *, activation):
    # Single K step: accumulate in registers, no f32 VMEM scratch round-trip.
    acc = jnp.dot(x_ref[...], w_ref[...], preferred_element_type=jnp.float32) + b_ref[...]
    if activation == "gelu":
        # TODO(synk): HF BERT uses erf-gelu; tanh-approx gelu used here (EUP-friendly, ~1e-3 close)
        acc = jax.nn.gelu(acc, approximate=True)
    o_ref[...] = acc.astype(o_ref.dtype)


def _linear_acc_kernel(x_ref, w_ref, b_ref, o_ref, acc_ref, *, activation):
    # Multi K step: f32 VMEM accumulator with pl.when init/finalize.
    @pl.when(pl.program_id(2) == 0)
    def _():
        acc_ref[...] = jnp.zeros_like(acc_ref)

    acc_ref[...] += jnp.dot(x_ref[...], w_ref[...], preferred_element_type=jnp.float32)

    @pl.when(pl.program_id(2) == pl.num_programs(2) - 1)
    def _():
        acc = acc_ref[...] + b_ref[...]
        if activation == "gelu":
            acc = jax.nn.gelu(acc, approximate=True)
        o_ref[...] = acc.astype(o_ref.dtype)


def linear(x, w, b, activation=None):
    """act(x @ w + b). x: (M, K) bf16, w: (K, N) bf16, b: (1, N) f32 -> (M, N) bf16."""
    M, K = x.shape
    _, N = w.shape
    tm = _pick_tile(M, (1024, 512, 256, 128, 64, 32, 16, 8))
    tn = _pick_tile(N, (768, 512, 256, 128))
    tk = _pick_tile(K, (3072, 1536, 768, 512, 256, 128))

    if K // tk == 1:
        # No reduction axis in the grid -> no accumulator scratch, direct store.
        return pl.pallas_call(
            functools.partial(_linear_1k_kernel, activation=activation),
            out_shape=jax.ShapeDtypeStruct((M, N), jnp.bfloat16),
            grid_spec=pltpu.PrefetchScalarGridSpec(
                num_scalar_prefetch=0,
                grid=(M // tm, N // tn),
                in_specs=[
                    pl.BlockSpec((tm, K), lambda i, j: (i, 0)),
                    pl.BlockSpec((K, tn), lambda i, j: (0, j)),
                    pl.BlockSpec((1, tn), lambda i, j: (0, j)),
                ],
                out_specs=pl.BlockSpec((tm, tn), lambda i, j: (i, j)),
            ),
            compiler_params=pltpu.CompilerParams(
                dimension_semantics=("parallel", "parallel"),
                vmem_limit_bytes=VMEM_LIMIT,
            ),
        )(x, w, b)

    return pl.pallas_call(
        functools.partial(_linear_acc_kernel, activation=activation),
        out_shape=jax.ShapeDtypeStruct((M, N), jnp.bfloat16),
        grid_spec=pltpu.PrefetchScalarGridSpec(
            num_scalar_prefetch=0,
            grid=(M // tm, N // tn, K // tk),
            in_specs=[
                pl.BlockSpec((tm, tk), lambda i, j, k: (i, k)),
                pl.BlockSpec((tk, tn), lambda i, j, k: (k, j)),
                pl.BlockSpec((1, tn), lambda i, j, k: (0, j)),
            ],
            out_specs=pl.BlockSpec((tm, tn), lambda i, j, k: (i, j)),
            scratch_shapes=[pltpu.VMEM((tm, tn), jnp.float32)],
        ),
        compiler_params=pltpu.CompilerParams(
            dimension_semantics=("parallel", "parallel", "arbitrary"),
            vmem_limit_bytes=VMEM_LIMIT,
        ),
    )(x, w, b)


# --------------- fused linear + residual add + LayerNorm epilogue ---------------

def _linear_res_ln_kernel(x_ref, w_ref, b_ref, res_ref, g_ref, beta_ref, o_ref):
    # Full output row (N == H) resident -> LN reduction runs in the matmul epilogue.
    acc = jnp.dot(x_ref[...], w_ref[...], preferred_element_type=jnp.float32) + b_ref[...]
    y = acc + res_ref[...].astype(jnp.float32)
    mu = jnp.mean(y, axis=-1, keepdims=True)
    yc = y - mu
    var = jnp.mean(yc * yc, axis=-1, keepdims=True)
    inv = jax.lax.rsqrt(var + LN_EPS)
    o_ref[...] = (yc * inv * g_ref[...] + beta_ref[...]).astype(o_ref.dtype)


def linear_res_ln(x, w, b, residual, gamma, beta):
    """LayerNorm(residual + x @ w + b). Requires the whole (K, N) weight resident per step
    (true for bert-base's 768x768 and 3072x768 projections under the VMEM budget)."""
    M, K = x.shape
    _, N = w.shape
    tm = _pick_tile(M, (512, 256, 128, 64, 32, 16, 8))
    return pl.pallas_call(
        _linear_res_ln_kernel,
        out_shape=jax.ShapeDtypeStruct((M, N), jnp.bfloat16),
        grid_spec=pltpu.PrefetchScalarGridSpec(
            num_scalar_prefetch=0,
            grid=(M // tm,),
            in_specs=[
                pl.BlockSpec((tm, K), lambda i: (i, 0)),
                pl.BlockSpec((K, N), lambda i: (0, 0)),
                pl.BlockSpec((1, N), lambda i: (0, 0)),
                pl.BlockSpec((tm, N), lambda i: (i, 0)),
                pl.BlockSpec((1, N), lambda i: (0, 0)),
                pl.BlockSpec((1, N), lambda i: (0, 0)),
            ],
            out_specs=pl.BlockSpec((tm, N), lambda i: (i, 0)),
        ),
        compiler_params=pltpu.CompilerParams(
            dimension_semantics=("parallel",),
            vmem_limit_bytes=VMEM_LIMIT,
        ),
    )(x, w, b, residual, gamma, beta)


# ----------------------------- embedding add + LayerNorm -----------------------------

def _embed_ln_kernel(we_ref, pe_ref, te_ref, g_ref, beta_ref, o_ref):
    # Fused word + position + type embedding add (bf16 inputs), LayerNorm stats in f32.
    x = (we_ref[...].astype(jnp.float32) + pe_ref[...].astype(jnp.float32)
         + te_ref[...].astype(jnp.float32))
    mu = jnp.mean(x, axis=-1, keepdims=True)
    xc = x - mu
    var = jnp.mean(xc * xc, axis=-1, keepdims=True)
    inv = jax.lax.rsqrt(var + LN_EPS)
    o_ref[...] = (xc * inv * g_ref[...] + beta_ref[...]).astype(o_ref.dtype)


def embed_add_layernorm(we, pe, te, gamma, beta):
    """we/te: (B, S, H) bf16, pe: (1, S, H) bf16 -> (B, S, H) bf16 = LN(we + pe + te)."""
    B, S, H = we.shape
    tok_spec = pl.BlockSpec((None, S, H), lambda b: (b, 0, 0))
    return pl.pallas_call(
        _embed_ln_kernel,
        out_shape=jax.ShapeDtypeStruct((B, S, H), jnp.bfloat16),
        grid=(B,),
        in_specs=[
            tok_spec,
            pl.BlockSpec((None, S, H), lambda b: (0, 0, 0)),   # positions shared across batch
            tok_spec,
            pl.BlockSpec((1, H), lambda b: (0, 0)),
            pl.BlockSpec((1, H), lambda b: (0, 0)),
        ],
        out_specs=tok_spec,
        compiler_params=pltpu.CompilerParams(
            dimension_semantics=("parallel",),
            vmem_limit_bytes=VMEM_LIMIT,
        ),
    )(we, pe, te, gamma, beta)


# ----------------------------- attention -----------------------------

def _attn_kernel(qkv_ref, bias_ref, o_ref):
    # qkv_ref: (S, 3H) bf16 for one batch element (Q columns pre-scaled by 1/sqrt(D));
    # bias_ref: (1, S) f32 additive mask; o_ref: (S, H) bf16 lane-dense output.
    # Head slicing happens here in VMEM -> no host-side head split/merge transposes.
    # TODO(synk): for S >~ 256 switch to flash-style online softmax over a kv grid axis so
    # the per-head (S, S) scores never exceed the VMEM budget (matters first on v7x's 64 MiB).
    qkv = qkv_ref[...]
    bias = bias_ref[...]                                   # (1, S) broadcasts over query rows
    ctxs = []
    for h in range(NUM_HEADS):
        lo = h * HEAD_DIM
        q = qkv[:, lo:lo + HEAD_DIM]                       # (S, D) bf16
        k = qkv[:, HIDDEN + lo:HIDDEN + lo + HEAD_DIM]     # (S, D)
        v = qkv[:, 2 * HIDDEN + lo:2 * HIDDEN + lo + HEAD_DIM]
        s = jax.lax.dot_general(q, k, (((1,), (1,)), ((), ())),
                                preferred_element_type=jnp.float32)   # (S, S) = q @ k.T
        s = s + bias
        s = s - jnp.max(s, axis=-1, keepdims=True)
        p = jnp.exp(s)
        p = p * pl.reciprocal(jnp.sum(p, axis=-1, keepdims=True), approx=True)
        ctxs.append(jnp.dot(p.astype(v.dtype), v, preferred_element_type=jnp.float32))
    # One lane-dense 768-wide store instead of per-head 64-lane masked stores.
    o_ref[...] = jnp.concatenate(ctxs, axis=-1).astype(o_ref.dtype)


def attention(qkv, mask_bias):
    """qkv: (B, S, 3H) bf16 fused QKV slab; mask_bias: (B, 1, S) f32 additive (0 or -1e9)."""
    B, S, H3 = qkv.shape
    H = H3 // 3
    return pl.pallas_call(
        _attn_kernel,
        out_shape=jax.ShapeDtypeStruct((B, S, H), jnp.bfloat16),
        grid=(B,),
        in_specs=[
            pl.BlockSpec((None, S, H3), lambda b: (b, 0, 0)),
            pl.BlockSpec((None, 1, S), lambda b: (b, 0, 0)),
        ],
        out_specs=pl.BlockSpec((None, S, H), lambda b: (b, 0, 0)),
        compiler_params=pltpu.CompilerParams(
            dimension_semantics=("parallel",),
            vmem_limit_bytes=VMEM_LIMIT,
        ),
    )(qkv, mask_bias)


# ----------------------------- parameters -----------------------------

def init_params(key):
    keys = iter(jax.random.split(key, 256))
    scale = 1.0 / math.sqrt(HEAD_DIM)

    def nrm(shape, std=0.02):
        return (std * jax.random.normal(next(keys), shape)).astype(jnp.float32)

    def ones(shape):
        return jnp.ones(shape, jnp.float32)

    def zeros(shape):
        return jnp.zeros(shape, jnp.float32)

    params = {
        # embedding tables in bf16: halves DMA bytes of the mem-bound embed+LN kernel
        "word_emb": nrm((VOCAB, HIDDEN)).astype(jnp.bfloat16),
        "pos_emb": nrm((MAX_POS, HIDDEN)).astype(jnp.bfloat16),
        "type_emb": nrm((TYPE_VOCAB, HIDDEN)).astype(jnp.bfloat16),
        "emb_ln_g": ones((1, HIDDEN)), "emb_ln_b": zeros((1, HIDDEN)),
        "layers": [],
        "pooler_w": nrm((HIDDEN, HIDDEN)), "pooler_b": zeros((1, HIDDEN)),
        "out_w": nrm((HIDDEN, 1)), "out_b": zeros((1, 1)),
    }
    for _ in range(NUM_LAYERS):
        wq, wk, wv = nrm((HIDDEN, HIDDEN)), nrm((HIDDEN, HIDDEN)), nrm((HIDDEN, HIDDEN))
        bq, bk, bv = zeros((1, HIDDEN)), zeros((1, HIDDEN)), zeros((1, HIDDEN))
        # Q/K/V fused into one (H, 3H) projection; the 1/sqrt(head_dim) attention scale is
        # folded into the Q slice so the attention kernel never multiplies by it.
        # TODO(synk): if real HF checkpoints are loaded later, this scale-folding must be reapplied.
        wqkv = jnp.concatenate([wq * scale, wk, wv], axis=1).astype(jnp.bfloat16)
        bqkv = jnp.concatenate([bq * scale, bk, bv], axis=1)
        params["layers"].append({
            "wqkv": wqkv, "bqkv": bqkv,
            "wo": nrm((HIDDEN, HIDDEN)).astype(jnp.bfloat16), "bo": zeros((1, HIDDEN)),
            "ln1_g": ones((1, HIDDEN)), "ln1_b": zeros((1, HIDDEN)),
            "wi": nrm((HIDDEN, INTERMEDIATE)).astype(jnp.bfloat16), "bi": zeros((1, INTERMEDIATE)),
            "wf": nrm((INTERMEDIATE, HIDDEN)).astype(jnp.bfloat16), "bf": zeros((1, HIDDEN)),
            "ln2_g": ones((1, HIDDEN)), "ln2_b": zeros((1, HIDDEN)),
        })
    return params


# ----------------------------- forward pass -----------------------------

def bert_forward(params, ids, mask, token_type_ids):
    B, S = ids.shape
    H = HIDDEN

    # Embedding gathers stay in JAX (bf16 tables); the 3-way add + LayerNorm is one fused kernel.
    we = params["word_emb"][ids]                               # (B, S, H) bf16
    pe = params["pos_emb"][jnp.arange(S)][None, :, :]          # (1, S, H) bf16
    te = params["type_emb"][token_type_ids]                    # (B, S, H) bf16
    x = embed_add_layernorm(we, pe, te, params["emb_ln_g"], params["emb_ln_b"])
    x = x.reshape(B * S, H)                                    # bf16 activations from here on

    # Additive attention mask bias, (B, 1, S): 0 where attended, -1e9 where masked out.
    mask_bias = ((1.0 - mask.astype(jnp.float32)) * -1e9).reshape(B, 1, S)

    for layer in params["layers"]:
        # (B*S, 3H) fused QKV slab goes straight to the attention kernel (row-split reshape
        # only, no transposes / column slices on the host side).
        qkv = linear(x, layer["wqkv"], layer["bqkv"])
        ctx = attention(qkv.reshape(B, S, 3 * H), mask_bias)   # (B, S, H) lane-dense
        # Output projection with residual-add + LayerNorm fused into the matmul epilogue.
        x = linear_res_ln(ctx.reshape(B * S, H), layer["wo"], layer["bo"],
                          x, layer["ln1_g"], layer["ln1_b"])

        inter = linear(x, layer["wi"], layer["bi"], activation="gelu")
        x = linear_res_ln(inter, layer["wf"], layer["bf"],
                          x, layer["ln2_g"], layer["ln2_b"])

    # Pooler tanh(W_p h_[CLS] + b_p) and the Linear(768, 1) regression head stay in plain JAX:
    # at (B, 768) x (768, 1) an N=1-lane Pallas store is pure overhead (per perf review).
    cls = x.reshape(B, S, H)[:, 0, :].astype(jnp.float32)      # (B, H)
    pooled = jnp.tanh(cls @ params["pooler_w"] + params["pooler_b"])
    out = pooled @ params["out_w"] + params["out_b"]           # (B, 1) f32
    return out


# ----------------------------- main -----------------------------

if __name__ == "__main__":
    B, S = 2, 8
    root = jax.random.PRNGKey(0)
    k_param, k_ids, k_tt = jax.random.split(root, 3)

    params = init_params(k_param)

    ids = jax.random.randint(k_ids, (B, S), 0, VOCAB, dtype=jnp.int32)
    # attention mask: second sequence has 2 padding positions at the end
    mask = jnp.array([[1] * S, [1] * (S - 2) + [0] * 2], dtype=jnp.int32)
    token_type_ids = jax.random.randint(k_tt, (B, S), 0, TYPE_VOCAB, dtype=jnp.int32)

    out = bert_forward(params, ids, mask, token_type_ids)
    out = jax.block_until_ready(out)
    assert out.shape == (B, 1) and out.dtype == jnp.float32
    assert bool(jnp.all(jnp.isfinite(out)))
    print("KERNEL_OK")
</pallas_src>

<mosaic_0001>
module attributes {stable_mosaic.version = 11 : i64} {
  func.func @_embed_ln_kernel(%arg0: i32, %arg1: memref<1x8x768xbf16, #tpu.memory_space<vmem>>, %arg2: memref<1x8x768xbf16, #tpu.memory_space<vmem>>, %arg3: memref<1x8x768xbf16, #tpu.memory_space<vmem>>, %arg4: memref<1x768xf32, #tpu.memory_space<vmem>>, %arg5: memref<1x768xf32, #tpu.memory_space<vmem>>, %arg6: memref<1x8x768xbf16, #tpu.memory_space<vmem>>) attributes {dimension_semantics = [#tpu.dimension_semantics<parallel>], iteration_bounds = array<i64: 2>, scalar_prefetch = 0 : i64, scratch_operands = 0 : i64, tpu.core_type = #tpu.core_type<tc>, window_params = [{transform_indices = @transform_0, window_bounds = array<i64: 1, 8, 768>}, {pipeline_mode = #tpu.pipeline_mode<synchronous>, transform_indices = @transform_1, window_bounds = array<i64: 1, 8, 768>}, {transform_indices = @transform_2, window_bounds = array<i64: 1, 8, 768>}, {pipeline_mode = #tpu.pipeline_mode<synchronous>, transform_indices = @transform_3, window_bounds = array<i64: 1, 768>}, {pipeline_mode = #tpu.pipeline_mode<synchronous>, transform_indices = @transform_4, window_bounds = array<i64: 1, 768>}, {transform_indices = @transform_5, window_bounds = array<i64: 1, 8, 768>}]} {
    %c0 = arith.constant 0 : index
    %c0_0 = arith.constant 0 : index
    %c0_1 = arith.constant 0 : index
    %0 = vector.load %arg1[%c0, %c0_0, %c0_1] : memref<1x8x768xbf16, #tpu.memory_space<vmem>>, vector<1x8x768xbf16>
    %1 = vector.shape_cast %0 : vector<1x8x768xbf16> to vector<8x768xbf16>
    %2 = arith.extf %1 : vector<8x768xbf16> to vector<8x768xf32>
    %c0_2 = arith.constant 0 : index
    %c0_3 = arith.constant 0 : index
    %c0_4 = arith.constant 0 : index
    %3 = vector.load %arg2[%c0_2, %c0_3, %c0_4] : memref<1x8x768xbf16, #tpu.memory_space<vmem>>, vector<1x8x768xbf16>
    %4 = vector.shape_cast %3 : vector<1x8x768xbf16> to vector<8x768xbf16>
    %5 = arith.extf %4 : vector<8x768xbf16> to vector<8x768xf32>
    %6 = arith.addf %2, %5 : vector<8x768xf32>
    %c0_5 = arith.constant 0 : index
    %c0_6 = arith.constant 0 : index
    %c0_7 = arith.constant 0 : index
    %7 = vector.load %arg3[%c0_5, %c0_6, %c0_7] : memref<1x8x768xbf16, #tpu.memory_space<vmem>>, vector<1x8x768xbf16>
    %8 = vector.shape_cast %7 : vector<1x8x768xbf16> to vector<8x768xbf16>
    %9 = arith.extf %8 : vector<8x768xbf16> to vector<8x768xf32>
    %10 = arith.addf %6, %9 : vector<8x768xf32>
    %cst = arith.constant dense<0.000000e+00> : vector<8xf32>
    %11 = vector.multi_reduction <add>, %10, %cst [1] : vector<8x768xf32> to vector<8xf32>
    %12 = vector.shape_cast %11 : vector<8xf32> to vector<8x1xf32>
    %cst_8 = arith.constant 7.680000e+02 : f32
    %13 = vector.broadcast %cst_8 : f32 to vector<8x1xf32>
    %14 = arith.divf %12, %13 : vector<8x1xf32>
    %15 = vector.broadcast %14 : vector<8x1xf32> to vector<8x768xf32>
    %16 = arith.subf %10, %15 : vector<8x768xf32>
    %17 = arith.mulf %16, %16 : vector<8x768xf32>
    %cst_9 = arith.constant dense<0.000000e+00> : vector<8xf32>
    %18 = vector.multi_reduction <add>, %17, %cst_9 [1] : vector<8x768xf32> to vector<8xf32>
    %19 = vector.shape_cast %18 : vector<8xf32> to vector<8x1xf32>
    %cst_10 = arith.constant 7.680000e+02 : f32
    %20 = vector.broadcast %cst_10 : f32 to vector<8x1xf32>
    %21 = arith.divf %19, %20 : vector<8x1xf32>
    %cst_11 = arith.constant 9.99999996E-13 : f32
    %22 = vector.broadcast %cst_11 : f32 to vector<8x1xf32>
    %23 = arith.addf %21, %22 : vector<8x1xf32>
    %24 = math.rsqrt %23 : vector<8x1xf32>
    %25 = vector.broadcast %24 : vector<8x1xf32> to vector<8x768xf32>
    %26 = arith.mulf %16, %25 : vector<8x768xf32>
    %c0_12 = arith.constant 0 : index
    %c0_13 = arith.constant 0 : index
    %27 = vector.load %arg4[%c0_12, %c0_13] : memref<1x768xf32, #tpu.memory_space<vmem>>, vector<1x768xf32>
    %28 = vector.broadcast %27 : vector<1x768xf32> to vector<8x768xf32>
    %29 = arith.mulf %26, %28 : vector<8x768xf32>
    %c0_14 = arith.constant 0 : index
    %c0_15 = arith.constant 0 : index
    %30 = vector.load %arg5[%c0_14, %c0_15] : memref<1x768xf32, #tpu.memory_space<vmem>>, vector<1x768xf32>
    %31 = vector.broadcast %30 : vector<1x768xf32> to vector<8x768xf32>
    %32 = arith.addf %29, %31 : vector<8x768xf32>
    %33 = arith.truncf %32 : vector<8x768xf32> to vector<8x768xbf16>
    %c0_16 = arith.constant 0 : index
    %c0_17 = arith.constant 0 : index
    %c0_18 = arith.constant 0 : index
    %34 = vector.load %arg6[%c0_16, %c0_17, %c0_18] : memref<1x8x768xbf16, #tpu.memory_space<vmem>>, vector<1x8x768xbf16>
    %35 = vector.shape_cast %34 : vector<1x8x768xbf16> to vector<8x768xbf16>
    %36 = vector.shape_cast %33 : vector<8x768xbf16> to vector<1x8x768xbf16>
    tpu.vector_store %arg6[%c0_16, %c0_17, %c0_18], %36 {strides = array<i32>} : memref<1x8x768xbf16, #tpu.memory_space<vmem>>, vector<1x8x768xbf16>,
    return
  }
  func.func @transform_0(%arg0: i32) -> (i32, i32, i32) {
    %c0_i32 = arith.constant 0 : i32
    %c0_i32_0 = arith.constant 0 : i32
    %c0_i32_1 = arith.constant 0 : i32
    return %arg0, %c0_i32, %c0_i32_0 : i32, i32, i32
  }
  func.func @transform_1(%arg0: i32) -> (i32, i32, i32) {
    %c0_i32 = arith.constant 0 : i32
    %c0_i32_0 = arith.constant 0 : i32
    %c0_i32_1 = arith.constant 0 : i32
    %c0_i32_2 = arith.constant 0 : i32
    return %c0_i32, %c0_i32_0, %c0_i32_1 : i32, i32, i32
  }
  func.func @transform_2(%arg0: i32) -> (i32, i32, i32) {
    %c0_i32 = arith.constant 0 : i32
    %c0_i32_0 = arith.constant 0 : i32
    %c0_i32_1 = arith.constant 0 : i32
    return %arg0, %c0_i32, %c0_i32_0 : i32, i32, i32
  }
  func.func @transform_3(%arg0: i32) -> (i32, i32) {
    %c0_i32 = arith.constant 0 : i32
    %c0_i32_0 = arith.constant 0 : i32
    %c0_i32_1 = arith.constant 0 : i32
    return %c0_i32, %c0_i32_0 : i32, i32
  }
  func.func @transform_4(%arg0: i32) -> (i32, i32) {
    %c0_i32 = arith.constant 0 : i32
    %c0_i32_0 = arith.constant 0 : i32
    %c0_i32_1 = arith.constant 0 : i32
    return %c0_i32, %c0_i32_0 : i32, i32
  }
  func.func @transform_5(%arg0: i32) -> (i32, i32, i32) {
    %c0_i32 = arith.constant 0 : i32
    %c0_i32_0 = arith.constant 0 : i32
    %c0_i32_1 = arith.constant 0 : i32
    return %arg0, %c0_i32, %c0_i32_0 : i32, i32, i32
  }
}

</mosaic_0001>

<llo_original>
// kernel: tpu_custom_call.1
$region0: #{tpu_custom_call.1}
  #allocation0 [shape = 'u32[]', space=smem, size = 0x4, offset = 0x4, fixed_abs, tag = 'smem constant byte address 0x4 - core index']
  #allocation1 [shape = 'u32[144,128]{1,0:T(1,128)}', space=vmem, size = 0x12000, scoped, tag = 'internal scratch']
  %s0 = inlined_call_operand.hbm [shape: bf16[2,8,768], index: 0, kind: input, shape index: {}]
  %s1 = inlined_call_operand.hbm [shape: bf16[1,8,768], index: 1, kind: input, shape index: {}]
  %s2 = inlined_call_operand.hbm [shape: bf16[2,8,768], index: 2, kind: input, shape index: {}]
  %s3 = inlined_call_operand.hbm [shape: f32[1,768], index: 3, kind: input, shape index: {}]
  %s4 = inlined_call_operand.vmem [shape: f32[1,768], index: 4, kind: input, shape index: {}]
  %s5 = inlined_call_operand.hbm [shape: bf16[2,8,768], index: 5, kind: output, shape index: {}]
  %s6 = sld [smem:[#allocation0]]
  $region69: #{tpu_custom_call.1} parent=0
    _
  %s8 = ssub.s32 1, %s6
  %s9 = scalar_select 0, %s8, %s6
  $region1: #{tpu_custom_call.1} parent=0
    #allocation2 [shape = 'u8[24576]{0}', space=vmem, size = 0x6000, scoped, tag = 'input window, operand 0']
    #allocation3 [shape = 's32[2]{0}', space=sflag, size = 0x8, scoped, tag = 'scoped memory for tpu_custom_call.1']
    #allocation4 [shape = 's32[2]{0}', space=sflag, size = 0x8, scoped, tag = 'scoped memory for tpu_custom_call.1']
    #allocation5 [shape = 'u8[12288]{0}', space=vmem, size = 0x3000, scoped, tag = 'input window, operand 1, single buffered']
    #allocation6 [shape = 's32[1]{0}', space=sflag, size = 0x4, scoped, tag = 'scoped memory for tpu_custom_call.1']
    #allocation7 [shape = 'u8[24576]{0}', space=vmem, size = 0x6000, scoped, tag = 'input window, operand 2']
    #allocation8 [shape = 'u8[3072]{0}', space=vmem, size = 0xc00, scoped, tag = 'input window, operand 3, single buffered']
    #allocation9 [shape = 'u8[24576]{0}', space=vmem, size = 0x6000, scoped, tag = 'output window, operand 0']
    %10 = vsyncpa [#allocation3], 0
    %s11 = scalar_lea.sflag [#allocation3], 1
    %12 = vsyncpa %s11, 0
    %13 = vsyncpa [#allocation6], 0
    %14 = vsyncpa [#allocation4], 0
    %s15 = scalar_lea.sflag [#allocation4], 1
    %16 = vsyncpa %s15, 0
    loop: start=0, step=1, limit=4
    $region2: #{tpu_custom_call.1} parent=1 // loop_pre_header
      _
    $region3: #{tpu_custom_call.1} parent=1 // loop_header
      %s18 = sphi 0, %s22
      %p19 = scmp.ge.s32.totalorder %s18, 4
      %s28 = sphi 0, %s30
      %s31 = sphi 0, %s28
      %s32 = sphi 0, %s31
      %s48 = sphi 0, %s32
      %s52 = sphi 0, %s52
      %s54 = sphi 0, %s52
      %s55 = sphi 0, %s54
      %s69 = sphi 0, %s55
      %s75 = sphi 0, %s77
      %s78 = sphi 0, %s75
      %s79 = sphi 0, %s78
      %s95 = sphi 0, %s79
      %s99 = sphi 0, %s99
      %s101 = sphi 0, %s99
      %s102 = sphi 0, %s101
      %s116 = sphi 0, %s102
      %s120 = sphi 0, %s120
      %s122 = sphi 0, %s120
      %s123 = sphi 0, %s122
      %s137 = sphi 0, %s123
      %s143 = sphi 0, %s145
      %s146 = sphi 0, %s143
      %s147 = sphi 0, %s146
      %s163 = sphi 0, %s147
    $region4: #{tpu_custom_call.1} parent=1 // loop_header_branch
      %21 = sbr.rel (%p19) target = $region8
    $region5: #{tpu_custom_call.1} parent=1 // loop_body
      %s23 = ssub.s32 %s18, 1
      %s24 = ssub.s32 %s18, 2
      %s25 = sadd.s32 %s18, 1
      %s26 = ssub.s32 %s18, %s25
      %p27 = scmp.eq.s32.totalorder %s26, 0
      %s29 = sadd.s32 %s28, 1
      %s30 = scalar_select %p27, %s28, %s29
      %p33 = pneg %p27
      %p34 = scmp.eq.s32.totalorder %s18, 1
      %p35 = por %p33, %p34
      %p36 = scmp.ne.s32.totalorder %s28, %s31
      %p37 = scmp.eq.s32.totalorder %s18, 0
      %p38 = por %p36, %p37
      %p39 = scmp.ne.s32.totalorder %s28, %s31
      %p40 = scmp.eq.s32.totalorder %s23, 1
      %p41 = por %p39, %p40
      %p42 = scmp.ne.s32.totalorder %s31, %s32
      %p43 = scmp.eq.s32.totalorder %s23, 0
      %p44 = por %p42, %p43
      %p45 = scmp.ne.s32.totalorder %s31, %s32
      %p46 = scmp.eq.s32.totalorder %s24, 1
      %p47 = por %p45, %p46
      %p49 = scmp.ne.s32.totalorder %s32, %s48
      %p50 = scmp.eq.s32.totalorder %s24, 0
      %p51 = por %p49, %p50
      %s53 = sadd.s32 %s52, 1
      %p56 = scmp.eq.s32.totalorder %s18, 1
      %p57 = scmp.ne.s32.totalorder %s52, %s54
      %p58 = scmp.eq.s32.totalorder %s18, 0
      %p59 = por %p57, %p58
      %p60 = scmp.ne.s32.totalorder %s52, %s54
      %p61 = scmp.eq.s32.totalorder %s23, 1
      %p62 = por %p60, %p61
      %p63 = scmp.ne.s32.totalorder %s54, %s55
      %p64 = scmp.eq.s32.totalorder %s23, 0
      %p65 = por %p63, %p64
      %p66 = scmp.ne.s32.totalorder %s54, %s55
      %p67 = scmp.eq.s32.totalorder %s24, 1
      %p68 = por %p66, %p67
      %p70 = scmp.ne.s32.totalorder %s55, %s69
      %p71 = scmp.eq.s32.totalorder %s24, 0
      %p72 = por %p70, %p71
      %s73 = ssub.s32 %s18, %s25
      %p74 = scmp.eq.s32.totalorder %s73, 0
      %s76 = sadd.s32 %s75, 1
      %s77 = scalar_select %p74, %s75, %s76
      %p80 = pneg %p74
      %p81 = scmp.eq.s32.totalorder %s18, 1
      %p82 = por %p80, %p81
      %p83 = scmp.ne.s32.totalorder %s75, %s78
      %p84 = scmp.eq.s32.totalorder %s18, 0
      %p85 = por %p83, %p84
      %p86 = scmp.ne.s32.totalorder %s75, %s78
      %p87 = scmp.eq.s32.totalorder %s23, 1
      %p88 = por %p86, %p87
      %p89 = scmp.ne.s32.totalorder %s78, %s79
      %p90 = scmp.eq.s32.totalorder %s23, 0
      %p91 = por %p89, %p90
      %p92 = scmp.ne.s32.totalorder %s78, %s79
      %p93 = scmp.eq.s32.totalorder %s24, 1
      %p94 = por %p92, %p93
      %p96 = scmp.ne.s32.totalorder %s79, %s95
      %p97 = scmp.eq.s32.totalorder %s24, 0
      %p98 = por %p96, %p97
      %s100 = sadd.s32 %s99, 1
      %p103 = scmp.eq.s32.totalorder %s18, 1
      %p104 = scmp.ne.s32.totalorder %s99, %s101
      %p105 = scmp.eq.s32.totalorder %s18, 0
      %p106 = por %p104, %p105
      %p107 = scmp.ne.s32.totalorder %s99, %s101
      %p108 = scmp.eq.s32.totalorder %s23, 1
      %p109 = por %p107, %p108
      %p110 = scmp.ne.s32.totalorder %s101, %s102
      %p111 = scmp.eq.s32.totalorder %s23, 0
      %p112 = por %p110, %p111
      %p113 = scmp.ne.s32.totalorder %s101, %s102
      %p114 = scmp.eq.s32.totalorder %s24, 1
      %p115 = por %p113, %p114
      %p117 = scmp.ne.s32.totalorder %s102, %s116
      %p118 = scmp.eq.s32.totalorder %s24, 0
      %p119 = por %p117, %p118
      %s121 = sadd.s32 %s120, 1
      %p124 = scmp.eq.s32.totalorder %s18, 1
      %p125 = scmp.ne.s32.totalorder %s120, %s122
      %p126 = scmp.eq.s32.totalorder %s18, 0
      %p127 = por %p125, %p126
      %p128 = scmp.ne.s32.totalorder %s120, %s122
      %p129 = scmp.eq.s32.totalorder %s23, 1
      %p130 = por %p128, %p129
      %p131 = scmp.ne.s32.totalorder %s122, %s123
      %p132 = scmp.eq.s32.totalorder %s23, 0
      %p133 = por %p131, %p132
      %p134 = scmp.ne.s32.totalorder %s122, %s123
      %p135 = scmp.eq.s32.totalorder %s24, 1
      %p136 = por %p134, %p135
      %p138 = scmp.ne.s32.totalorder %s123, %s137
      %p139 = scmp.eq.s32.totalorder %s24, 0
      %p140 = por %p138, %p139
      %s141 = ssub.s32 %s18, %s25
      %p142 = scmp.eq.s32.totalorder %s141, 0
      %s144 = sadd.s32 %s143, 1
      %s145 = scalar_select %p142, %s143, %s144
      %p148 = pneg %p142
      %p149 = scmp.eq.s32.totalorder %s18, 1
      %p150 = por %p148, %p149
      %p151 = scmp.ne.s32.totalorder %s143, %s146
      %p152 = scmp.eq.s32.totalorder %s18, 0
      %p153 = por %p151, %p152
      %p154 = scmp.ne.s32.totalorder %s143, %s146
      %p155 = scmp.eq.s32.totalorder %s23, 1
      %p156 = por %p154, %p155
      %p157 = scmp.ne.s32.totalorder %s146, %s147
      %p158 = scmp.eq.s32.totalorder %s23, 0
      %p159 = por %p157, %p158
      %p160 = scmp.ne.s32.totalorder %s146, %s147
      %p161 = scmp.eq.s32.totalorder %s24, 1
      %p162 = por %p160, %p161
      %p164 = scmp.ne.s32.totalorder %s147, %s163
      %p165 = scmp.eq.s32.totalorder %s24, 0
      %p166 = por %p164, %p165
      %p167 = scmp.le.s32.totalorder 1, %s18
      %p168 = scmp.lt.s32.totalorder %s18, 3
      %p169 = pnand %p167, %p168
      %p170 = pneg %p169
      // Predicated region
      $region9: #{tpu_custom_call.1} parent=5 // pred_check
        _
      $region10: #{tpu_custom_call.1} parent=5 // pred_check_branch
        %172 = sbr.rel (%p169) target = $region12
      $region11: #{tpu_custom_call.1} parent=5 // pred_region
        %s173 = ssub.s32 %s18, 1
        // Predicated region
        $region13: #{tpu_custom_call.1} parent=11 // pred_check
          %p174 = pneg %p65
        $region14: #{tpu_custom_call.1} parent=11 // pred_check_branch
          %176 = sbr.rel (%p174) target = $region16
        $region15: #{tpu_custom_call.1} parent=11 // pred_region
          %s178 = ssub.s32 384, 384
          %179 = vsyncadd [#allocation6], %s178
          %s181 = sshll.u32 [#allocation5], 4
          %s182 = int_to_ptr.vmem [resolvable:$true] %s181
          %184 = dma.hbm_to_vmem [thread:$0]  %s1, 384, %s182, [#allocation6]
        $region16: #{tpu_custom_call.1} parent=11 // pred_fallthru
          _
        // Predicated region
        $region17: #{tpu_custom_call.1} parent=11 // pred_check
          %p185 = pneg %p112
        $region18: #{tpu_custom_call.1} parent=11 // pred_check_branch
          %187 = sbr.rel (%p185) target = $region20
        $region19: #{tpu_custom_call.1} parent=11 // pred_region
          %s189 = ssub.s32 96, 96
          %190 = vsyncadd [#allocation6], %s189
          %s192 = sshll.u32 [#allocation8], 4
          %s193 = int_to_ptr.vmem [resolvable:$true] %s192
          %195 = dma.hbm_to_vmem [thread:$0]  %s3, 96, %s193, [#allocation6]
        $region20: #{tpu_custom_call.1} parent=11 // pred_fallthru
          _
        // Predicated region
        $region21: #{tpu_custom_call.1} parent=11 // pred_check
          %p196 = pneg %p133
        $region22: #{tpu_custom_call.1} parent=11 // pred_check_branch
          %198 = sbr.rel (%p196) target = $region24
        $region23: #{tpu_custom_call.1} parent=11 // pred_region
          _
        $region24: #{tpu_custom_call.1} parent=11 // pred_fallthru
          _
      $region12: #{tpu_custom_call.1} parent=5 // pred_fallthru
        _
      %p199 = scmp.lt.s32.totalorder %s18, 2
      // Predicated region
      $region25: #{tpu_custom_call.1} parent=5 // pred_check
        %p200 = pneg %p199
      $region26: #{tpu_custom_call.1} parent=5 // pred_check_branch
        %202 = sbr.rel (%p200) target = $region28
      $region27: #{tpu_custom_call.1} parent=5 // pred_region
        // Predicated region
        $region29: #{tpu_custom_call.1} parent=27 // pred_check
          %p203 = pneg %p38
        $region30: #{tpu_custom_call.1} parent=27 // pred_check_branch
          %205 = sbr.rel (%p203) target = $region32
        $region31: #{tpu_custom_call.1} parent=27 // pred_region
          %s206 = sand.u32 %s18, 1
          %s207 = scalar_lea.sflag [#allocation3], %s206
          %s208 = sand.u32 %s28, 1
          %s209 = smul.addr %s208, 24
          %s210 = scalar_lea.vmem [#allocation2], %s209
          %s212 = ssub.s32 384, 384
          %213 = vsyncadd %s207, %s212
          %s214 = smul.addr %s18, 6
          %s215 = smul.addr %s214, 64
          %s216 = scalar_lea.hbm %s0, %s215
          %s218 = sshll.u32 %s210, 4
          %s219 = int_to_ptr.vmem [resolvable:$true] %s218
          %221 = dma.hbm_to_vmem [thread:$0]  %s216, 384, %s219, %s207
        $region32: #{tpu_custom_call.1} parent=27 // pred_fallthru
          _
        // Predicated region
        $region33: #{tpu_custom_call.1} parent=27 // pred_check
          %p222 = pneg %p85
        $region34: #{tpu_custom_call.1} parent=27 // pred_check_branch
          %224 = sbr.rel (%p222) target = $region36
        $region35: #{tpu_custom_call.1} parent=27 // pred_region
          %s225 = sand.u32 %s18, 1
          %s226 = scalar_lea.sflag [#allocation3], %s225
          %s227 = sand.u32 %s75, 1
          %s228 = smul.addr %s227, 24
          %s229 = scalar_lea.vmem [#allocation7], %s228
          %s231 = ssub.s32 384, 384
          %232 = vsyncadd %s226, %s231
          %s233 = smul.addr %s18, 6
          %s234 = smul.addr %s233, 64
          %s235 = scalar_lea.hbm %s2, %s234
          %s237 = sshll.u32 %s229, 4
          %s238 = int_to_ptr.vmem [resolvable:$true] %s237
          %240 = dma.hbm_to_vmem [thread:$0]  %s235, 384, %s238, %s226
        $region36: #{tpu_custom_call.1} parent=27 // pred_fallthru
          _
      $region28: #{tpu_custom_call.1} parent=5 // pred_fallthru
        _
      %p241 = scmp.le.s32.totalorder 1, %s18
      %p242 = scmp.lt.s32.totalorder %s18, 3
      %p243 = pnand %p241, %p242
      %p244 = pneg %p243
      // Predicated region
      $region37: #{tpu_custom_call.1} parent=5 // pred_check
        _
      $region38: #{tpu_custom_call.1} parent=5 // pred_check_branch
        %246 = sbr.rel (%p243) target = $region40
      $region39: #{tpu_custom_call.1} parent=5 // pred_region
        %s247 = ssub.s32 %s18, 1
        %s248 = sand.u32 %s23, 1
        %s249 = scalar_lea.sflag [#allocation3], %s248
        %s250 = sand.u32 %s31, 1
        %s251 = smul.addr %s250, 24
        %s252 = scalar_lea.vmem [#allocation2], %s251
        // Predicated region
        $region41: #{tpu_custom_call.1} parent=39 // pred_check
          %p253 = pneg %p44
        $region42: #{tpu_custom_call.1} parent=39 // pred_check_branch
          %255 = sbr.rel (%p253) target = $region44
        $region43: #{tpu_custom_call.1} parent=39 // pred_region
          %256 = dma.done %s249, 384
        $region44: #{tpu_custom_call.1} parent=39 // pred_fallthru
          _
        // Predicated region
        $region45: #{tpu_custom_call.1} parent=39 // pred_check
          %p257 = pneg %p65
        $region46: #{tpu_custom_call.1} parent=39 // pred_check_branch
          %259 = sbr.rel (%p257) target = $region48
        $region47: #{tpu_custom_call.1} parent=39 // pred_region
          %260 = dma.done [#allocation6], 384
        $region48: #{tpu_custom_call.1} parent=39 // pred_fallthru
          _
        %s261 = sand.u32 %s23, 1
        %s262 = scalar_lea.sflag [#allocation3], %s261
        %s263 = sand.u32 %s78, 1
        %s264 = smul.addr %s263, 24
        %s265 = scalar_lea.vmem [#allocation7], %s264
        // Predicated region
        $region49: #{tpu_custom_call.1} parent=39 // pred_check
          %p266 = pneg %p91
        $region50: #{tpu_custom_call.1} parent=39 // pred_check_branch
          %268 = sbr.rel (%p266) target = $region52
        $region51: #{tpu_custom_call.1} parent=39 // pred_region
          %269 = dma.done %s262, 384
        $region52: #{tpu_custom_call.1} parent=39 // pred_fallthru
          _
        // Predicated region
        $region53: #{tpu_custom_call.1} parent=39 // pred_check
          %p270 = pneg %p112
        $region54: #{tpu_custom_call.1} parent=39 // pred_check_branch
          %272 = sbr.rel (%p270) target = $region56
        $region55: #{tpu_custom_call.1} parent=39 // pred_region
          %273 = dma.done [#allocation6], 96
        $region56: #{tpu_custom_call.1} parent=39 // pred_fallthru
          _
        %s274 = sand.u32 %s23, 1
        %s275 = scalar_lea.sflag [#allocation3], %s274
        %s276 = sand.u32 %s31, 1
        %s277 = smul.addr %s276, 24
        %s278 = scalar_lea.vmem [#allocation2], %s277
        %p279 = pneg %p44
        %p280 = pneg %p41
        %p281 = pneg %p65
        %p282 = pneg %p62
        %s283 = sand.u32 %s23, 1
        %s284 = scalar_lea.sflag [#allocation3], %s283
        %s285 = sand.u32 %s78, 1
        %s286 = smul.addr %s285, 24
        %s287 = scalar_lea.vmem [#allocation7], %s286
        %p288 = pneg %p91
        %p289 = pneg %p88
        %p290 = pneg %p112
        %p291 = pneg %p109
        %p292 = pneg %p133
        %p293 = pneg %p130
        %p294 = pneg %p159
        %p295 = pneg %p156
        %s296 = sand.u32 %s146, 1
        %s297 = scalar_lea.sflag [#allocation4], %s296
        %s298 = sand.u32 %s146, 1
        %s299 = smul.addr %s298, 24
        %s300 = scalar_lea.vmem [#allocation9], %s299
        %v301 = vld [vmem:[%s252] sm:$0xff]
        %v302 = vld [vmem:[%s252 + $0x8] sm:$0xff]
        %v303 = vld [vmem:[%s252 + $0x10] sm:$0xff]
        %v304 = vunpack.c.l.bf16 %v301
        %v305 = vunpack.c.h.bf16 %v301
        %v306 = vunpack.c.l.bf16 %v302
        %v307 = vunpack.c.h.bf16 %v302
        %v308 = vunpack.c.l.bf16 %v303
        %v309 = vunpack.c.h.bf16 %v303
        %v310 = vld [vmem:[#allocation5] sm:$0xff]
        %v311 = vld [vmem:[#allocation5 + $0x8] sm:$0xff]
        %v312 = vld [vmem:[#allocation5 + $0x10] sm:$0xff]
        %v313 = vunpack.c.l.bf16 %v310
        %v314 = vunpack.c.h.bf16 %v310
        %v315 = vunpack.c.l.bf16 %v311
        %v316 = vunpack.c.h.bf16 %v311
        %v317 = vunpack.c.l.bf16 %v312
        %v318 = vunpack.c.h.bf16 %v312
        %v319 = vadd.f32 %v304, %v313
        %v320 = vadd.f32 %v305, %v314
        %v321 = vadd.f32 %v306, %v315
        %v322 = vadd.f32 %v307, %v316
        %v323 = vadd.f32 %v308, %v317
        %v324 = vadd.f32 %v309, %v318
        %v325 = vld [vmem:[%s265] sm:$0xff]
        %v326 = vld [vmem:[%s265 + $0x8] sm:$0xff]
        %v327 = vld [vmem:[%s265 + $0x10] sm:$0xff]
        %v328 = vunpack.c.l.bf16 %v325
        %v329 = vunpack.c.h.bf16 %v325
        %v330 = vunpack.c.l.bf16 %v326
        %v331 = vunpack.c.h.bf16 %v326
        %v332 = vunpack.c.l.bf16 %v327
        %v333 = vunpack.c.h.bf16 %v327
        %v334 = vadd.f32 %v319, %v328
        %v335 = vadd.f32 %v320, %v329
        %v336 = vadd.f32 %v321, %v330
        %v337 = vadd.f32 %v322, %v331
        %v338 = vadd.f32 %v323, %v332
        %v339 = vadd.f32 %v324, %v333
        %v340 = vadd.f32 %v334, %v335
        %v341 = vadd.f32 %v340, %v336
        %v342 = vadd.f32 %v341, %v337
        %v343 = vadd.f32 %v342, %v338
        %v344 = vadd.f32 %v343, %v339
        %345 = vadd.xlane.f32.xlu0 %v344
        %v346 = vpop.xlane.xlu0 %345
        %v347 = vrcp.pop 768.0
        %v348 = vmul.f32 %v346, %v347
        %v349 = vsub.f32 %v334, %v348
        %v350 = vsub.f32 %v335, %v348
        %v351 = vsub.f32 %v336, %v348
        %v352 = vsub.f32 %v337, %v348
        %v353 = vsub.f32 %v338, %v348
        %v354 = vsub.f32 %v339, %v348
        %v355 = vmul.f32 %v349, %v349
        %v356 = vmul.f32 %v350, %v350
        %v357 = vmul.f32 %v351, %v351
        %v358 = vmul.f32 %v352, %v352
        %v359 = vmul.f32 %v353, %v353
        %v360 = vmul.f32 %v354, %v354
        %v361 = vadd.f32 %v355, %v356
        %v362 = vadd.f32 %v361, %v357
        %v363 = vadd.f32 %v362, %v358
        %v364 = vadd.f32 %v363, %v359
        %v365 = vadd.f32 %v364, %v360
        %366 = vadd.xlane.f32.xlu0 %v365
        %v367 = vpop.xlane.xlu0 %366
        %v368 = vmul.f32 %v367, %v347
        %v369 = vadd.f32 %v368, 1e-12
        %v370 = vrsqrt.pop %v369
        %v371 = vmul.f32 %v349, %v370
        %v372 = vmul.f32 %v350, %v370
        %v373 = vmul.f32 %v351, %v370
        %v374 = vmul.f32 %v352, %v370
        %v375 = vmul.f32 %v353, %v370
        %v376 = vmul.f32 %v354, %v370
        %v377 = vld [vmem:[#allocation8] sm:$0x3f]
        %v379 = vlaneseq
        %v380 = vshrl.u32 %v379, 7
        %v381 = vsub.s32 0, %v380
        %v382 = vrot.slane %v377, %v381
        %v383 = vlaneseq
        %v384 = vshrl.u32 %v383, 7
        %v385 = vsub.s32 1, %v384
        %v386 = vrot.slane %v377, %v385
        %v387 = vlaneseq
        %v388 = vshrl.u32 %v387, 7
        %v389 = vsub.s32 2, %v388
        %v390 = vrot.slane %v377, %v389
        %v391 = vlaneseq
        %v392 = vshrl.u32 %v391, 7
        %v393 = vsub.s32 3, %v392
        %v394 = vrot.slane %v377, %v393
        %v395 = vlaneseq
        %v396 = vshrl.u32 %v395, 7
        %v397 = vsub.s32 4, %v396
        %v398 = vrot.slane %v377, %v397
        %v399 = vlaneseq
        %v400 = vshrl.u32 %v399, 7
        %v401 = vsub.s32 5, %v400
        %v402 = vrot.slane %v377, %v401
        %v409 = vmul.f32 %v371, %v382
        %v410 = vmul.f32 %v372, %v386
        %v411 = vmul.f32 %v373, %v390
        %v412 = vmul.f32 %v374, %v394
        %v413 = vmul.f32 %v375, %v398
        %v414 = vmul.f32 %v376, %v402
        %v415 = vld [vmem:[%s4] sm:$0x3f]
        %v417 = vlaneseq
        %v418 = vshrl.u32 %v417, 7
        %v419 = vsub.s32 0, %v418
        %v420 = vrot.slane %v415, %v419
        %v421 = vlaneseq
        %v422 = vshrl.u32 %v421, 7
        %v423 = vsub.s32 1, %v422
        %v424 = vrot.slane %v415, %v423
        %v425 = vlaneseq
        %v426 = vshrl.u32 %v425, 7
        %v427 = vsub.s32 2, %v426
        %v428 = vrot.slane %v415, %v427
        %v429 = vlaneseq
        %v430 = vshrl.u32 %v429, 7
        %v431 = vsub.s32 3, %v430
        %v432 = vrot.slane %v415, %v431
        %v433 = vlaneseq
        %v434 = vshrl.u32 %v433, 7
        %v435 = vsub.s32 4, %v434
        %v436 = vrot.slane %v415, %v435
        %v437 = vlaneseq
        %v438 = vshrl.u32 %v437, 7
        %v439 = vsub.s32 5, %v438
        %v440 = vrot.slane %v415, %v439
        %v447 = vadd.f32 %v409, %v420
        %v448 = vadd.f32 %v410, %v424
        %v449 = vadd.f32 %v411, %v428
        %v450 = vadd.f32 %v412, %v432
        %v451 = vadd.f32 %v413, %v436
        %v452 = vadd.f32 %v414, %v440
        %v453 = vpack.c.bf16 %v447, %v447
        %v454 = vpack.c.bf16 %v448, %v448
        %v455 = vpack.c.bf16 %v449, %v449
        %v456 = vpack.c.bf16 %v450, %v450
        %v457 = vpack.c.bf16 %v451, %v451
        %v458 = vpack.c.bf16 %v452, %v452
        %v465 = vunpack.c.l.b16 %v453
        %v466 = vunpack.c.l.b16 %v454
        %v467 = vunpack.c.l.b16 %v455
        %v468 = vunpack.c.l.b16 %v456
        %v469 = vunpack.c.l.b16 %v457
        %v470 = vunpack.c.l.b16 %v458
        %v471 = vpack.c.b16 %v466, %v465
        %v472 = vpack.c.b16 %v468, %v467
        %v473 = vpack.c.b16 %v470, %v469
        %477 = vst [vmem:[%s300] sm:$0xff] %v471
        %478 = vst [vmem:[%s300 + $0x8] sm:$0xff] %v472
        %479 = vst [vmem:[%s300 + $0x10] sm:$0xff] %v473
        %s480 = sand.u32 %s146, 1
        %s481 = scalar_lea.sflag [#allocation4], %s480
        %s482 = sand.u32 %s146, 1
        %s483 = smul.addr %s482, 24
        %s484 = scalar_lea.vmem [#allocation9], %s483
        // Predicated region
        $region57: #{tpu_custom_call.1} parent=39 // pred_check
          %p485 = pneg %p156
        $region58: #{tpu_custom_call.1} parent=39 // pred_check_branch
          %487 = sbr.rel (%p485) target = $region60
        $region59: #{tpu_custom_call.1} parent=39 // pred_region
          %s489 = ssub.s32 384, 384
          %490 = vsyncadd %s481, %s489
          %s491 = smul.addr %s23, 6
          %s492 = smul.addr %s491, 64
          %s493 = scalar_lea.hbm %s5, %s492
          %s495 = sshll.u32 %s484, 4
          %s496 = int_to_ptr.vmem [resolvable:$true] %s495
          %498 = dma.vmem_to_hbm [thread:$0]  %s496, 384, %s493, %s481
        $region60: #{tpu_custom_call.1} parent=39 // pred_fallthru
          _
      $region40: #{tpu_custom_call.1} parent=5 // pred_fallthru
        _
      %p499 = scmp.le.s32.totalorder 2, %s18
      // Predicated region
      $region61: #{tpu_custom_call.1} parent=5 // pred_check
        %p500 = pneg %p499
      $region62: #{tpu_custom_call.1} parent=5 // pred_check_branch
        %502 = sbr.rel (%p500) target = $region64
      $region63: #{tpu_custom_call.1} parent=5 // pred_region
        %s503 = ssub.s32 %s18, 2
        // Predicated region
        $region65: #{tpu_custom_call.1} parent=63 // pred_check
          %p504 = pneg %p162
        $region66: #{tpu_custom_call.1} parent=63 // pred_check_branch
          %506 = sbr.rel (%p504) target = $region68
        $region67: #{tpu_custom_call.1} parent=63 // pred_region
          %s507 = sand.u32 %s147, 1
          %s508 = scalar_lea.sflag [#allocation4], %s507
          %s509 = sand.u32 %s147, 1
          %s510 = smul.addr %s509, 24
          %s511 = scalar_lea.vmem [#allocation9], %s510
          %512 = dma.done %s508, 384
        $region68: #{tpu_custom_call.1} parent=63 // pred_fallthru
          _
      $region64: #{tpu_custom_call.1} parent=5 // pred_fallthru
        _
    $region6: #{tpu_custom_call.1} parent=1 // loop_footer
      %s22 = sadd.s32 1, %s18
    $region7: #{tpu_custom_call.1} parent=1 // loop_footer_branch
      %17 = sbr.rel target = $region3
    $region8: #{tpu_custom_call.1} parent=1 // loop_exit
      _
    %513 = vsyncpa [#allocation3], 1
    %s514 = scalar_lea.sflag [#allocation3], 1
    %515 = vsyncpa %s514, 1
    %516 = vsyncpa [#allocation6], 1
    %517 = vsyncpa [#allocation4], 1
    %s518 = scalar_lea.sflag [#allocation4], 1
    %519 = vsyncpa %s518, 1

</llo_original>
